<compile_context>
chip_gen: v5e
topology: v5e:2x2
jax: 0.10.0
libtpu: 0.0.40
codegen_flags: <defaults>
</compile_context>

<pallas_src>
import functools

import jax
import jax.numpy as jnp
from jax.experimental import pallas as pl
from jax.experimental.pallas import tpu as pltpu


def _round_up(x, m):
    return ((x + m - 1) // m) * m


# -----------------------------------------------------------------------------
# Kernel
# -----------------------------------------------------------------------------
def omics_weight_kernel(
    smiles_ref,   # [TB, TK]    f32 (cast to matmul dtype in VMEM)
    gep_ref,      # [TB, G]     f32
    cnv_ref,      # [TB, G]     f32
    mut_ref,      # [TB, G]     f32
    ws_ref,       # [TK, HP]    matmul dtype (reference encoder folded into fc1)
    wctx_ref,     # [3, G, HP]  matmul dtype (context encoders folded into fc1)
    bh_ref,       # [1, HP]     f32          (all biases folded)
    f2w_ref,      # [HP, OP]    matmul dtype (fc2 weight, zero-padded)
    f2b_ref,      # [1, OP]     f32          (fc2 bias, padding filled w/ -1e30)
    fused_ref,    # [TB, G]     out
    w_ref,        # [TB, OP]    f32 out (softmax weights, lane-padded)
    acc_ref,      # [TB, HP]    f32 scratch (fc1 pre-activation accumulator)
    *,
    approx_recip: bool,
):
    k = pl.program_id(1)
    nk = pl.num_programs(1)
    cd = ws_ref.dtype   # matmul operand dtype (bf16 fast path / f32 validation)

    # --- k == 0: contexts + folded biases initialize the fc1 accumulator -----
    @pl.when(k == 0)
    def _():
        acc_ref[...] = (
            jnp.dot(gep_ref[...].astype(cd), wctx_ref[0],
                    preferred_element_type=jnp.float32)
            + jnp.dot(cnv_ref[...].astype(cd), wctx_ref[1],
                      preferred_element_type=jnp.float32)
            + jnp.dot(mut_ref[...].astype(cd), wctx_ref[2],
                      preferred_element_type=jnp.float32)
            + bh_ref[...])

    # --- every k: one K-slab of the folded smiles matmul (f32 accumulation) ---
    acc_ref[...] += jnp.dot(smiles_ref[...].astype(cd), ws_ref[...],
                            preferred_element_type=jnp.float32)

    # --- last k: relu -> fc2 -> softmax -> fused convex combination ----------
    @pl.when(k == nk - 1)
    def _():
        h = jnp.maximum(acc_ref[...], 0.0)                          # [TB, HP]
        logits = (jnp.dot(h.astype(cd), f2w_ref[...],
                          preferred_element_type=jnp.float32)
                  + f2b_ref[...])                                   # [TB, OP] f32
        logits = logits - jnp.max(logits, axis=1, keepdims=True)
        e = jnp.exp(logits)
        w = e * pl.reciprocal(jnp.sum(e, axis=1, keepdims=True),
                              approx=approx_recip)                  # [TB, OP]
        # The module semantics always blend with the first 3 softmax weights.
        fused_ref[...] = (w[:, 0:1] * gep_ref[...]
                          + w[:, 1:2] * cnv_ref[...]
                          + w[:, 2:3] * mut_ref[...]).astype(fused_ref.dtype)
        w_ref[...] = w.astype(w_ref.dtype)


# -----------------------------------------------------------------------------
# Parameter construction (PyTorch Linear semantics, stored as [in, out])
# -----------------------------------------------------------------------------
def init_params(key, hidden_size, smiles_embedding_size, number_of_genes,
                smiles_vocabulary_size, output_dim):
    ks = jax.random.split(key, 12)
    E, G, V, H, O = (smiles_embedding_size, number_of_genes,
                     smiles_vocabulary_size, hidden_size, output_dim)

    def lin(kw, kb, fan_in, fan_out):
        bound = float(fan_in) ** -0.5
        w = jax.random.uniform(kw, (fan_in, fan_out), jnp.float32, -bound, bound)
        b = jax.random.uniform(kb, (1, fan_out), jnp.float32, -bound, bound)
        return w, b

    ref_w, ref_b = lin(ks[0], ks[1], E, 1)        # reference_encoder
    gep_w, gep_b = lin(ks[2], ks[3], G, V)        # context_gep_encoder
    cnv_w, cnv_b = lin(ks[4], ks[5], G, V)        # context_cnv_encoder
    mut_w, mut_b = lin(ks[6], ks[7], G, V)        # context_mut_encoder
    fc1_w, fc1_b = lin(ks[8], ks[9], 4 * V, H)    # fc1
    fc2_w, fc2_b = lin(ks[10], ks[11], H, O)      # fc2
    return dict(ref_w=ref_w, ref_b=ref_b,
                gep_w=gep_w, gep_b=gep_b,
                cnv_w=cnv_w, cnv_b=cnv_b,
                mut_w=mut_w, mut_b=mut_b,
                fc1_w=fc1_w, fc1_b=fc1_b,
                fc2_w=fc2_w, fc2_b=fc2_b)


def prepare_params(p, V, E, O, matmul_dtype=jnp.bfloat16):
    """One-time (static / inference params) algebraic fold of encoders into fc1.

    NOTE: must be re-run whenever the underlying weights change (training).
    """
    H = p["fc1_w"].shape[1]
    HP = max(128, _round_up(H, 128))   # lane-dense hidden width
    OP = max(8, _round_up(O, 8))       # lane-padded fc2 output width

    f1 = p["fc1_w"]                                     # [4V, H]
    f1s, f1g, f1c, f1m = f1[:V], f1[V:2 * V], f1[2 * V:3 * V], f1[3 * V:]
    ref_vec = p["ref_w"][:, 0]                          # [E]
    ref_b = p["ref_b"][0, 0]                            # scalar

    # reference encoder folded with the smiles slab of fc1: [V*E, H]
    w_smiles = (f1s[:, None, :] * ref_vec[None, :, None]).reshape(V * E, H)
    # context encoders folded with their fc1 slabs: [3, G, H]
    w_ctx = jnp.stack([p["gep_w"] @ f1g, p["cnv_w"] @ f1c, p["mut_w"] @ f1m])
    # all biases folded into one [1, H] vector
    b_h = (p["fc1_b"]
           + ref_b * jnp.sum(f1s, axis=0, keepdims=True)
           + p["gep_b"] @ f1g + p["cnv_b"] @ f1c + p["mut_b"] @ f1m)

    def pad_h(a):  # zero-pad the hidden (last) axis H -> HP
        pad = [(0, 0)] * (a.ndim - 1) + [(0, HP - H)]
        return jnp.pad(a, pad)

    w_smiles = pad_h(w_smiles)                          # [V*E, HP]
    w_ctx = pad_h(w_ctx)                                # [3, G, HP]
    b_h = pad_h(b_h)                                    # [1, HP]  (pad -> relu(0)=0)
    # fc2: zero rows for padded hidden, -1e30 bias on padded lanes -> softmax 0.
    f2w = jnp.zeros((HP, OP), jnp.float32).at[:H, :O].set(p["fc2_w"])
    f2b = jnp.full((1, OP), -1e30, jnp.float32).at[:, :O].set(p["fc2_b"])

    return dict(w_smiles=w_smiles.astype(matmul_dtype),
                w_ctx=w_ctx.astype(matmul_dtype),
                b_h=b_h.astype(jnp.float32),
                f2w=f2w.astype(matmul_dtype),
                f2b=f2b.astype(jnp.float32))


# -----------------------------------------------------------------------------
# Wrapper
# -----------------------------------------------------------------------------
def _tpu_vmem_capacity_bytes():
    try:
        return int(pltpu.get_tpu_info().vmem_capacity_bytes)
    except Exception:
        return 64 * 1024 * 1024   # conservative fallback: v7x per-TC VMEM


def omics_weight_layer(smiles, gep, cnv, mut, prep, output_dim=3,
                       fused_dtype=jnp.float32):
    B, V, E = smiles.shape
    G = gep.shape[1]
    K = V * E
    HP = prep["b_h"].shape[1]
    OP = prep["f2w"].shape[1]
    mm_dtype = prep["w_smiles"].dtype
    assert prep["w_smiles"].shape[0] == K
    # The fused combination always uses the first 3 softmax weights (module spec).
    assert 3 <= output_dim <= OP

    # Reshape only (free); no wrapper-side cast pass over the largest activation:
    # the kernel casts activation tiles to the matmul dtype inside VMEM.
    smiles_flat = smiles.reshape(B, K)

    # ---- generation-aware VMEM budget & batch tile ---------------------------
    vmem_cap = _tpu_vmem_capacity_bytes()
    big_vmem = vmem_cap >= 100 * 1024 * 1024            # v5e / v6e (128 MiB)
    vmem_limit = int(min(0.78 * vmem_cap, 100 * 1024 * 1024))

    cap = 512 if big_vmem else 256
    if B <= 64:
        TB = B                                          # single tile, tiny batch
    else:
        # >= 2 grid steps so v7x's second TensorCore gets work; bigger tiles on
        # 128-MiB chips to amortize the ~0.35us/step pipeline overhead.
        TB = min(cap, _round_up(pl.cdiv(B, 2), 8))
    grid_b = pl.cdiv(B, TB)

    # ---- K-tiling of the folded smiles weight (streams it when too big) ------
    w_bytes = prep["w_smiles"].dtype.itemsize
    k_budget = vmem_limit // 3
    KT = 1
    if K % 128 == 0 and K * HP * w_bytes > k_budget:
        for cand in range(2, 65):
            if K % cand == 0 and (K // cand) % 128 == 0:
                KT = cand
                if (K // cand) * HP * w_bytes <= k_budget:
                    break
    TK = K // KT
    grid = (grid_b, KT)

    act = lambda shape: pl.BlockSpec(shape, lambda i, k: (i, 0))    # batch-tiled
    # Constant-index weights: single-buffered -> halves resident-weight VMEM.
    res2 = lambda shape: pl.BlockSpec(shape, lambda i, k: (0, 0),
                                      pipeline_mode=pl.Buffered(1))
    res3 = lambda shape: pl.BlockSpec(shape, lambda i, k: (0, 0, 0),
                                      pipeline_mode=pl.Buffered(1))
    if KT == 1:
        ws_spec = pl.BlockSpec((TK, HP), lambda i, k: (0, 0),
                               pipeline_mode=pl.Buffered(1))
    else:
        # streamed along K -> keep default double buffering for DMA overlap
        ws_spec = pl.BlockSpec((TK, HP), lambda i, k: (k, 0))

    in_specs = [
        pl.BlockSpec((TB, TK), lambda i, k: (i, k)),    # smiles_flat (f32)
        act((TB, G)),                                   # gep
        act((TB, G)),                                   # cnv
        act((TB, G)),                                   # mut
        ws_spec,                                        # w_smiles
        res3((3, G, HP)),                               # w_ctx
        res2((1, HP)),                                  # b_h
        res2((HP, OP)),                                 # f2w (padded)
        res2((1, OP)),                                  # f2b (padded)
    ]
    out_specs = (act((TB, G)), act((TB, OP)))
    out_shape = (jax.ShapeDtypeStruct((B, G), fused_dtype),
                 jax.ShapeDtypeStruct((B, OP), jnp.float32))

    kernel = functools.partial(omics_weight_kernel,
                               approx_recip=(mm_dtype != jnp.float32))

    fused, w_pad = pl.pallas_call(
        kernel,
        grid=grid,
        in_specs=in_specs,
        out_specs=out_specs,
        out_shape=out_shape,
        scratch_shapes=[pltpu.VMEM((TB, HP), jnp.float32)],
        compiler_params=pltpu.CompilerParams(
            dimension_semantics=("parallel", "arbitrary"),
            vmem_limit_bytes=vmem_limit,
        ),
    )(smiles_flat, gep, cnv, mut,
      prep["w_smiles"], prep["w_ctx"], prep["b_h"], prep["f2w"], prep["f2b"])

    return fused, w_pad[:, :output_dim]


# -----------------------------------------------------------------------------
# Pure-JAX reference of the original PyTorch forward (un-folded, f32)
# -----------------------------------------------------------------------------
def _reference(smiles, gep, cnv, mut, p):
    s = jnp.squeeze(smiles @ p["ref_w"] + p["ref_b"], -1)           # [B, V]
    g = gep @ p["gep_w"] + p["gep_b"]
    c = cnv @ p["cnv_w"] + p["cnv_b"]
    m = mut @ p["mut_w"] + p["mut_b"]
    combined = jnp.concatenate([s, g, c, m], axis=1)
    x = jax.nn.relu(combined @ p["fc1_w"] + p["fc1_b"])
    x = x @ p["fc2_w"] + p["fc2_b"]
    w = jax.nn.softmax(x, axis=1)
    fused = w[:, 0:1] * gep + w[:, 1:2] * cnv + w[:, 2:3] * mut
    return fused, w


if __name__ == "__main__":
    # Small shapes consistent with the module's constructor semantics.
    B = 2     # batch
    E = 8     # smiles_embedding_size
    V = 16    # smiles_vocabulary_size (smiles token axis)
    G = 32    # number_of_genes
    H = 32    # hidden_size
    O = 3     # output_dim

    key = jax.random.PRNGKey(0)
    k_par, k_s, k_g, k_c, k_m = jax.random.split(key, 5)

    params = init_params(k_par, H, E, G, V, O)
    smiles = jax.random.normal(k_s, (B, V, E), jnp.float32)
    gep = jax.random.normal(k_g, (B, G), jnp.float32)
    cnv = jax.random.normal(k_c, (B, G), jnp.float32)
    mut = jax.random.normal(k_m, (B, G), jnp.float32)

    ref_fused, ref_weights = _reference(smiles, gep, cnv, mut, params)

    # (1) f32 parameter path: validates the encoder->fc1 folds at tight tolerance.
    prep_f32 = prepare_params(params, V, E, O, matmul_dtype=jnp.float32)
    fused32, w32 = omics_weight_layer(smiles, gep, cnv, mut, prep_f32, O)
    jax.block_until_ready((fused32, w32))
    assert jnp.allclose(fused32, ref_fused, atol=1e-4, rtol=1e-4)
    assert jnp.allclose(w32, ref_weights, atol=1e-4, rtol=1e-4)

    # (2) bf16 matmul fast path (f32 MXU accumulation): looser tolerance purely
    #     from bf16 operand rounding.
    prep_bf16 = prepare_params(params, V, E, O, matmul_dtype=jnp.bfloat16)
    fused16, w16 = omics_weight_layer(smiles, gep, cnv, mut, prep_bf16, O)
    jax.block_until_ready((fused16, w16))
    assert jnp.allclose(fused16, ref_fused, atol=3e-2, rtol=3e-2)
    assert jnp.allclose(w16, ref_weights, atol=3e-2, rtol=3e-2)

    # TODO(synk): optional int8 weight quantization of w_smiles/w_ctx (v5e/v6e
    # only; v7x MXU has no int path) is not applied -- bf16 is the default.
    print("KERNEL_OK")
</pallas_src>

<mosaic_0001>
module attributes {stable_mosaic.version = 11 : i64} {
  func.func @omics_weight_kernel(%arg0: i32, %arg1: i32, %arg2: memref<2x128xf32, #tpu.memory_space<vmem>>, %arg3: memref<2x32xf32, #tpu.memory_space<vmem>>, %arg4: memref<2x32xf32, #tpu.memory_space<vmem>>, %arg5: memref<2x32xf32, #tpu.memory_space<vmem>>, %arg6: memref<128x128xf32, #tpu.memory_space<vmem>>, %arg7: memref<3x32x128xf32, #tpu.memory_space<vmem>>, %arg8: memref<1x128xf32, #tpu.memory_space<vmem>>, %arg9: memref<128x8xf32, #tpu.memory_space<vmem>>, %arg10: memref<1x8xf32, #tpu.memory_space<vmem>>, %arg11: memref<2x32xf32, #tpu.memory_space<vmem>>, %arg12: memref<2x8xf32, #tpu.memory_space<vmem>>, %arg13: memref<2x128xf32, #tpu.memory_space<vmem>>) attributes {dimension_semantics = [#tpu.dimension_semantics<parallel>, #tpu.dimension_semantics<arbitrary>], iteration_bounds = array<i64: 1, 1>, scalar_prefetch = 0 : i64, scratch_operands = 1 : i64, tpu.core_type = #tpu.core_type<tc>, window_params = [{transform_indices = @transform_0, window_bounds = array<i64: 2, 128>}, {transform_indices = @transform_1, window_bounds = array<i64: 2, 32>}, {transform_indices = @transform_2, window_bounds = array<i64: 2, 32>}, {transform_indices = @transform_3, window_bounds = array<i64: 2, 32>}, {pipeline_mode = #tpu.pipeline_mode<synchronous>, transform_indices = @transform_4, window_bounds = array<i64: 128, 128>}, {pipeline_mode = #tpu.pipeline_mode<synchronous>, transform_indices = @transform_5, window_bounds = array<i64: 3, 32, 128>}, {pipeline_mode = #tpu.pipeline_mode<synchronous>, transform_indices = @transform_6, window_bounds = array<i64: 1, 128>}, {pipeline_mode = #tpu.pipeline_mode<synchronous>, transform_indices = @transform_7, window_bounds = array<i64: 128, 8>}, {pipeline_mode = #tpu.pipeline_mode<synchronous>, transform_indices = @transform_8, window_bounds = array<i64: 1, 8>}, {transform_indices = @transform_9, window_bounds = array<i64: 2, 32>}, {transform_indices = @transform_10, window_bounds = array<i64: 2, 8>}]} {
    %c0_i32 = arith.constant 0 : i32
    %0 = arith.cmpi eq, %arg1, %c0_i32 : i32
    %1 = arith.extui %0 : i1 to i32
    %c0_i32_0 = arith.constant 0 : i32
    %2 = arith.cmpi ne, %1, %c0_i32_0 : i32
    scf.if %2 {
      %c0_10 = arith.constant 0 : index
      %c0_11 = arith.constant 0 : index
      %12 = vector.load %arg3[%c0_10, %c0_11] : memref<2x32xf32, #tpu.memory_space<vmem>>, vector<2x32xf32>
      %c0_12 = arith.constant 0 : index
      %c0_13 = arith.constant 0 : index
      %c0_14 = arith.constant 0 : index
      %13 = vector.load %arg7[%c0_12, %c0_13, %c0_14] : memref<3x32x128xf32, #tpu.memory_space<vmem>>, vector<1x32x128xf32>
      %14 = vector.shape_cast %13 : vector<1x32x128xf32> to vector<32x128xf32>
      %cst_15 = arith.constant dense<0.000000e+00> : vector<2x128xf32>
      %15 = tpu.matmul %12, %14, %cst_15 {dimension_numbers = #tpu.dot_dimension_numbers<[1], [0], [0], [1], [0, 0, 1, 1], [], []>} : vector<2x32xf32>, vector<32x128xf32>, vector<2x128xf32> -> vector<2x128xf32>
      %c0_16 = arith.constant 0 : index
      %c0_17 = arith.constant 0 : index
      %16 = vector.load %arg4[%c0_16, %c0_17] : memref<2x32xf32, #tpu.memory_space<vmem>>, vector<2x32xf32>
      %c1 = arith.constant 1 : index
      %c0_18 = arith.constant 0 : index
      %c0_19 = arith.constant 0 : index
      %17 = vector.load %arg7[%c1, %c0_18, %c0_19] : memref<3x32x128xf32, #tpu.memory_space<vmem>>, vector<1x32x128xf32>
      %18 = vector.shape_cast %17 : vector<1x32x128xf32> to vector<32x128xf32>
      %cst_20 = arith.constant dense<0.000000e+00> : vector<2x128xf32>
      %19 = tpu.matmul %16, %18, %cst_20 {dimension_numbers = #tpu.dot_dimension_numbers<[1], [0], [0], [1], [0, 0, 1, 1], [], []>} : vector<2x32xf32>, vector<32x128xf32>, vector<2x128xf32> -> vector<2x128xf32>
      %20 = arith.addf %15, %19 : vector<2x128xf32>
      %c0_21 = arith.constant 0 : index
      %c0_22 = arith.constant 0 : index
      %21 = vector.load %arg5[%c0_21, %c0_22] : memref<2x32xf32, #tpu.memory_space<vmem>>, vector<2x32xf32>
      %c2 = arith.constant 2 : index
      %c0_23 = arith.constant 0 : index
      %c0_24 = arith.constant 0 : index
      %22 = vector.load %arg7[%c2, %c0_23, %c0_24] : memref<3x32x128xf32, #tpu.memory_space<vmem>>, vector<1x32x128xf32>
      %23 = vector.shape_cast %22 : vector<1x32x128xf32> to vector<32x128xf32>
      %cst_25 = arith.constant dense<0.000000e+00> : vector<2x128xf32>
      %24 = tpu.matmul %21, %23, %cst_25 {dimension_numbers = #tpu.dot_dimension_numbers<[1], [0], [0], [1], [0, 0, 1, 1], [], []>} : vector<2x32xf32>, vector<32x128xf32>, vector<2x128xf32> -> vector<2x128xf32>
      %25 = arith.addf %20, %24 : vector<2x128xf32>
      %c0_26 = arith.constant 0 : index
      %c0_27 = arith.constant 0 : index
      %26 = vector.load %arg8[%c0_26, %c0_27] : memref<1x128xf32, #tpu.memory_space<vmem>>, vector<1x128xf32>
      %27 = vector.broadcast %26 : vector<1x128xf32> to vector<2x128xf32>
      %28 = arith.addf %25, %27 : vector<2x128xf32>
      %c0_28 = arith.constant 0 : index
      %c0_29 = arith.constant 0 : index
      %29 = vector.load %arg13[%c0_28, %c0_29] : memref<2x128xf32, #tpu.memory_space<vmem>>, vector<2x128xf32>
      tpu.vector_store %arg13[%c0_28, %c0_29], %28 {strides = array<i32>} : memref<2x128xf32, #tpu.memory_space<vmem>>, vector<2x128xf32>,
    } else {
    }
    %c0 = arith.constant 0 : index
    %c0_1 = arith.constant 0 : index
    %3 = vector.load %arg13[%c0, %c0_1] : memref<2x128xf32, #tpu.memory_space<vmem>>, vector<2x128xf32>
    %c0_2 = arith.constant 0 : index
    %c0_3 = arith.constant 0 : index
    %4 = vector.load %arg2[%c0_2, %c0_3] : memref<2x128xf32, #tpu.memory_space<vmem>>, vector<2x128xf32>
    %c0_4 = arith.constant 0 : index
    %c0_5 = arith.constant 0 : index
    %5 = vector.load %arg6[%c0_4, %c0_5] : memref<128x128xf32, #tpu.memory_space<vmem>>, vector<128x128xf32>
    %cst = arith.constant dense<0.000000e+00> : vector<2x128xf32>
    %6 = tpu.matmul %4, %5, %cst {dimension_numbers = #tpu.dot_dimension_numbers<[1], [0], [0], [1], [0, 0, 1, 1], [], []>} : vector<2x128xf32>, vector<128x128xf32>, vector<2x128xf32> -> vector<2x128xf32>
    %7 = arith.addf %3, %6 : vector<2x128xf32>
    %c0_6 = arith.constant 0 : index
    %c0_7 = arith.constant 0 : index
    %8 = vector.load %arg13[%c0_6, %c0_7] : memref<2x128xf32, #tpu.memory_space<vmem>>, vector<2x128xf32>
    tpu.vector_store %arg13[%c0_6, %c0_7], %7 {strides = array<i32>} : memref<2x128xf32, #tpu.memory_space<vmem>>, vector<2x128xf32>,
    %c0_i32_8 = arith.constant 0 : i32
    %9 = arith.cmpi eq, %arg1, %c0_i32_8 : i32
    %10 = arith.extui %9 : i1 to i32
    %c0_i32_9 = arith.constant 0 : i32
    %11 = arith.cmpi ne, %10, %c0_i32_9 : i32
    scf.if %11 {
      %c0_10 = arith.constant 0 : index
      %c0_11 = arith.constant 0 : index
      %12 = vector.load %arg13[%c0_10, %c0_11] : memref<2x128xf32, #tpu.memory_space<vmem>>, vector<2x128xf32>
      %cst_12 = arith.constant 0.000000e+00 : f32
      %13 = vector.broadcast %cst_12 : f32 to vector<2x128xf32>
      %14 = arith.maximumf %12, %13 : vector<2x128xf32>
      %c0_13 = arith.constant 0 : index
      %c0_14 = arith.constant 0 : index
      %15 = vector.load %arg9[%c0_13, %c0_14] : memref<128x8xf32, #tpu.memory_space<vmem>>, vector<128x8xf32>
      %cst_15 = arith.constant dense<0.000000e+00> : vector<2x8xf32>
      %16 = tpu.matmul %14, %15, %cst_15 {dimension_numbers = #tpu.dot_dimension_numbers<[1], [0], [0], [1], [0, 0, 1, 1], [], []>} : vector<2x128xf32>, vector<128x8xf32>, vector<2x8xf32> -> vector<2x8xf32>
      %c0_16 = arith.constant 0 : index
      %c0_17 = arith.constant 0 : index
      %17 = vector.load %arg10[%c0_16, %c0_17] : memref<1x8xf32, #tpu.memory_space<vmem>>, vector<1x8xf32>
      %18 = vector.broadcast %17 : vector<1x8xf32> to vector<2x8xf32>
      %19 = arith.addf %16, %18 : vector<2x8xf32>
      %cst_18 = arith.constant dense<0xFF800000> : vector<2xf32>
      %20 = vector.multi_reduction <maximumf>, %19, %cst_18 [1] : vector<2x8xf32> to vector<2xf32>
      %21 = vector.shape_cast %20 : vector<2xf32> to vector<2x1xf32>
      %22 = vector.broadcast %21 : vector<2x1xf32> to vector<2x8xf32>
      %23 = arith.subf %19, %22 : vector<2x8xf32>
      %24 = math.exp %23 : vector<2x8xf32>
      %cst_19 = arith.constant dense<0.000000e+00> : vector<2xf32>
      %25 = vector.multi_reduction <add>, %24, %cst_19 [1] : vector<2x8xf32> to vector<2xf32>
      %26 = vector.shape_cast %25 : vector<2xf32> to vector<2x1xf32>
      %27 = tpu.reciprocal %26 : vector<2x1xf32> -> vector<2x1xf32>
      %28 = vector.broadcast %27 : vector<2x1xf32> to vector<2x8xf32>
      %29 = arith.mulf %24, %28 : vector<2x8xf32>
      %30 = vector.extract_strided_slice %29 {offsets = [0, 0], sizes = [2, 1], strides = [1, 1]} : vector<2x8xf32> to vector<2x1xf32>
      %c0_20 = arith.constant 0 : index
      %c0_21 = arith.constant 0 : index
      %31 = vector.load %arg3[%c0_20, %c0_21] : memref<2x32xf32, #tpu.memory_space<vmem>>, vector<2x32xf32>
      %32 = vector.broadcast %30 : vector<2x1xf32> to vector<2x32xf32>
      %33 = arith.mulf %32, %31 : vector<2x32xf32>
      %34 = vector.extract_strided_slice %29 {offsets = [0, 1], sizes = [2, 1], strides = [1, 1]} : vector<2x8xf32> to vector<2x1xf32>
      %c0_22 = arith.constant 0 : index
      %c0_23 = arith.constant 0 : index
      %35 = vector.load %arg4[%c0_22, %c0_23] : memref<2x32xf32, #tpu.memory_space<vmem>>, vector<2x32xf32>
      %36 = vector.broadcast %34 : vector<2x1xf32> to vector<2x32xf32>
      %37 = arith.mulf %36, %35 : vector<2x32xf32>
      %38 = arith.addf %33, %37 : vector<2x32xf32>
      %39 = vector.extract_strided_slice %29 {offsets = [0, 2], sizes = [2, 1], strides = [1, 1]} : vector<2x8xf32> to vector<2x1xf32>
      %c0_24 = arith.constant 0 : index
      %c0_25 = arith.constant 0 : index
      %40 = vector.load %arg5[%c0_24, %c0_25] : memref<2x32xf32, #tpu.memory_space<vmem>>, vector<2x32xf32>
      %41 = vector.broadcast %39 : vector<2x1xf32> to vector<2x32xf32>
      %42 = arith.mulf %41, %40 : vector<2x32xf32>
      %43 = arith.addf %38, %42 : vector<2x32xf32>
      %c0_26 = arith.constant 0 : index
      %c0_27 = arith.constant 0 : index
      %44 = vector.load %arg11[%c0_26, %c0_27] : memref<2x32xf32, #tpu.memory_space<vmem>>, vector<2x32xf32>
      tpu.vector_store %arg11[%c0_26, %c0_27], %43 {strides = array<i32>} : memref<2x32xf32, #tpu.memory_space<vmem>>, vector<2x32xf32>,
      %c0_28 = arith.constant 0 : index
      %c0_29 = arith.constant 0 : index
      %45 = vector.load %arg12[%c0_28, %c0_29] : memref<2x8xf32, #tpu.memory_space<vmem>>, vector<2x8xf32>
      tpu.vector_store %arg12[%c0_28, %c0_29], %29 {strides = array<i32>} : memref<2x8xf32, #tpu.memory_space<vmem>>, vector<2x8xf32>,
    } else {
    }
    return
  }
  func.func @transform_0(%arg0: i32, %arg1: i32) -> (i32, i32) {
    %c0_i32 = arith.constant 0 : i32
    return %arg0, %arg1 : i32, i32
  }
  func.func @transform_1(%arg0: i32, %arg1: i32) -> (i32, i32) {
    %c0_i32 = arith.constant 0 : i32
    %c0_i32_0 = arith.constant 0 : i32
    return %arg0, %c0_i32 : i32, i32
  }
  func.func @transform_2(%arg0: i32, %arg1: i32) -> (i32, i32) {
    %c0_i32 = arith.constant 0 : i32
    %c0_i32_0 = arith.constant 0 : i32
    return %arg0, %c0_i32 : i32, i32
  }
  func.func @transform_3(%arg0: i32, %arg1: i32) -> (i32, i32) {
    %c0_i32 = arith.constant 0 : i32
    %c0_i32_0 = arith.constant 0 : i32
    return %arg0, %c0_i32 : i32, i32
  }
  func.func @transform_4(%arg0: i32, %arg1: i32) -> (i32, i32) {
    %c0_i32 = arith.constant 0 : i32
    %c0_i32_0 = arith.constant 0 : i32
    %c0_i32_1 = arith.constant 0 : i32
    return %c0_i32, %c0_i32_0 : i32, i32
  }
  func.func @transform_5(%arg0: i32, %arg1: i32) -> (i32, i32, i32) {
    %c0_i32 = arith.constant 0 : i32
    %c0_i32_0 = arith.constant 0 : i32
    %c0_i32_1 = arith.constant 0 : i32
    %c0_i32_2 = arith.constant 0 : i32
    return %c0_i32, %c0_i32_0, %c0_i32_1 : i32, i32, i32
  }
  func.func @transform_6(%arg0: i32, %arg1: i32) -> (i32, i32) {
    %c0_i32 = arith.constant 0 : i32
    %c0_i32_0 = arith.constant 0 : i32
    %c0_i32_1 = arith.constant 0 : i32
    return %c0_i32, %c0_i32_0 : i32, i32
  }
  func.func @transform_7(%arg0: i32, %arg1: i32) -> (i32, i32) {
    %c0_i32 = arith.constant 0 : i32
    %c0_i32_0 = arith.constant 0 : i32
    %c0_i32_1 = arith.constant 0 : i32
    return %c0_i32, %c0_i32_0 : i32, i32
  }
  func.func @transform_8(%arg0: i32, %arg1: i32) -> (i32, i32) {
    %c0_i32 = arith.constant 0 : i32
    %c0_i32_0 = arith.constant 0 : i32
    %c0_i32_1 = arith.constant 0 : i32
    return %c0_i32, %c0_i32_0 : i32, i32
  }
  func.func @transform_9(%arg0: i32, %arg1: i32) -> (i32, i32) {
    %c0_i32 = arith.constant 0 : i32
    %c0_i32_0 = arith.constant 0 : i32
    return %arg0, %c0_i32 : i32, i32
  }
  func.func @transform_10(%arg0: i32, %arg1: i32) -> (i32, i32) {
    %c0_i32 = arith.constant 0 : i32
    %c0_i32_0 = arith.constant 0 : i32
    return %arg0, %c0_i32 : i32, i32
  }
}

</mosaic_0001>

<llo_original>
// kernel: tpu_custom_call.1
$region0: #{tpu_custom_call.1}
  #allocation0 [shape = 'u32[]', space=smem, size = 0x4, offset = 0x4, fixed_abs, tag = 'smem constant byte address 0x4 - core index']
  #allocation1 [shape = 'u32[72,128]{1,0:T(1,128)}', space=vmem, size = 0x9000, scoped, tag = 'internal scratch']
  #allocation2 [shape = 'f32[2,128]{1,0:T(2,128)}', space=vmem, size = 0x400, scoped, tag = 'scratch operand']
  %s0 = inlined_call_operand.vmem [shape: f32[2,128], index: 0, kind: input, shape index: {}]
  %s1 = inlined_call_operand.vmem [shape: f32[2,32], index: 1, kind: input, shape index: {}]
  %s2 = inlined_call_operand.vmem [shape: f32[2,32], index: 2, kind: input, shape index: {}]
  %s3 = inlined_call_operand.vmem [shape: f32[2,32], index: 3, kind: input, shape index: {}]
  %s4 = inlined_call_operand.vmem [shape: f32[128,128], index: 4, kind: input, shape index: {}]
  %s5 = inlined_call_operand.hbm [shape: f32[3,32,128], index: 5, kind: input, shape index: {}]
  %s6 = inlined_call_operand.vmem [shape: f32[1,128], index: 6, kind: input, shape index: {}]
  %s7 = inlined_call_operand.vmem [shape: f32[128,8], index: 7, kind: input, shape index: {}]
  %s8 = inlined_call_operand.vmem [shape: f32[1,8], index: 8, kind: input, shape index: {}]
  %s9 = inlined_call_operand.hbm [shape: f32[2,32], index: 9, kind: output, shape index: {0}]
  %s10 = inlined_call_operand.hbm [shape: f32[2,8], index: 10, kind: output, shape index: {1}]
  %11 = xla_tuple %s9, %s10
  %s12 = sld [smem:[#allocation0]]
  $region66: #{tpu_custom_call.1} parent=0
    _
  %s14 = ssub.s32 1, %s12
  %s15 = scalar_select 0, %s14, %s12
  $region1: #{tpu_custom_call.1} parent=0
    #allocation3 [shape = 'u8[49152]{0}', space=vmem, size = 0xc000, scoped, tag = 'input window, operand 5, single buffered']
    #allocation4 [shape = 's32[1]{0}', space=sflag, size = 0x4, scoped, tag = 'scoped memory for tpu_custom_call.1']
    #allocation5 [shape = 's32[1]{0}', space=sflag, size = 0x4, scoped, tag = 'scoped memory for tpu_custom_call.1']
    #allocation6 [shape = 'u8[1024]{0}', space=vmem, size = 0x400, scoped, tag = 'output window, operand 0, single buffered']
    #allocation7 [shape = 'u8[1024]{0}', space=vmem, size = 0x400, scoped, tag = 'output window, operand 1, single buffered']
    #allocation8 [shape = 's32[1]{0}', space=sflag, size = 0x4, scoped, tag = 'scoped memory for tpu_custom_call.1']
    %16 = vsyncpa [#allocation4], 0
    %17 = vsyncpa [#allocation5], 0
    %18 = vsyncpa [#allocation8], 0
    // Predicated region
    $region2: #{tpu_custom_call.1} parent=1 // pred_check
      _
    $region3: #{tpu_custom_call.1} parent=1 // pred_check_branch
      %20 = sbr.rel (0) target = $region5
    $region4: #{tpu_custom_call.1} parent=1 // pred_region
      _
    $region5: #{tpu_custom_call.1} parent=1 // pred_fallthru
      _
    // Predicated region
    $region6: #{tpu_custom_call.1} parent=1 // pred_check
      _
    $region7: #{tpu_custom_call.1} parent=1 // pred_check_branch
      %22 = sbr.rel (0) target = $region9
    $region8: #{tpu_custom_call.1} parent=1 // pred_region
      _
    $region9: #{tpu_custom_call.1} parent=1 // pred_fallthru
      _
    // Predicated region
    $region10: #{tpu_custom_call.1} parent=1 // pred_check
      _
    $region11: #{tpu_custom_call.1} parent=1 // pred_check_branch
      %24 = sbr.rel (0) target = $region13
    $region12: #{tpu_custom_call.1} parent=1 // pred_region
      _
    $region13: #{tpu_custom_call.1} parent=1 // pred_fallthru
      _
    // Predicated region
    $region14: #{tpu_custom_call.1} parent=1 // pred_check
      _
    $region15: #{tpu_custom_call.1} parent=1 // pred_check_branch
      %26 = sbr.rel (0) target = $region17
    $region16: #{tpu_custom_call.1} parent=1 // pred_region
      _
    $region17: #{tpu_custom_call.1} parent=1 // pred_fallthru
      _
    // Predicated region
    $region18: #{tpu_custom_call.1} parent=1 // pred_check
      _
    $region19: #{tpu_custom_call.1} parent=1 // pred_check_branch
      %28 = sbr.rel (0) target = $region21
    $region20: #{tpu_custom_call.1} parent=1 // pred_region
      _
    $region21: #{tpu_custom_call.1} parent=1 // pred_fallthru
      _
    // Predicated region
    $region22: #{tpu_custom_call.1} parent=1 // pred_check
      _
    $region23: #{tpu_custom_call.1} parent=1 // pred_check_branch
      %30 = sbr.rel (0) target = $region25
    $region24: #{tpu_custom_call.1} parent=1 // pred_region
      %32 = vsyncadd [#allocation4], 0
      %s33 = sshll.u32 %s5, 4
      %s34 = int_to_ptr.hbm [resolvable:$true] %s33
      %s35 = sshll.u32 [#allocation3], 4
      %s36 = int_to_ptr.vmem [resolvable:$true] %s35
      %41 = dma.hbm_to_vmem [thread:$0]  %s34, 1536, %s36, [#allocation4], 128, 128, 8
    $region25: #{tpu_custom_call.1} parent=1 // pred_fallthru
      _
    // Predicated region
    $region26: #{tpu_custom_call.1} parent=1 // pred_check
      _
    $region27: #{tpu_custom_call.1} parent=1 // pred_check_branch
      %43 = sbr.rel (0) target = $region29
    $region28: #{tpu_custom_call.1} parent=1 // pred_region
      _
    $region29: #{tpu_custom_call.1} parent=1 // pred_fallthru
      _
    // Predicated region
    $region30: #{tpu_custom_call.1} parent=1 // pred_check
      _
    $region31: #{tpu_custom_call.1} parent=1 // pred_check_branch
      %45 = sbr.rel (0) target = $region33
    $region32: #{tpu_custom_call.1} parent=1 // pred_region
      _
    $region33: #{tpu_custom_call.1} parent=1 // pred_fallthru
      _
    // Predicated region
    $region34: #{tpu_custom_call.1} parent=1 // pred_check
      _
    $region35: #{tpu_custom_call.1} parent=1 // pred_check_branch
      %47 = sbr.rel (0) target = $region37
    $region36: #{tpu_custom_call.1} parent=1 // pred_region
      _
    $region37: #{tpu_custom_call.1} parent=1 // pred_fallthru
      _
    // Predicated region
    $region38: #{tpu_custom_call.1} parent=1 // pred_check
      _
    $region39: #{tpu_custom_call.1} parent=1 // pred_check_branch
      %49 = sbr.rel (0) target = $region41
    $region40: #{tpu_custom_call.1} parent=1 // pred_region
      %51 = dma.done [#allocation4], 1536
    $region41: #{tpu_custom_call.1} parent=1 // pred_fallthru
      _
    %p52 = scmp.eq.s32.totalorder 0, 0
    // Predicated region
    $region42: #{tpu_custom_call.1} parent=1 // pred_check
      %p53 = pneg %p52
    $region43: #{tpu_custom_call.1} parent=1 // pred_check_branch
      %55 = sbr.rel (%p53) target = $region45
    $region44: #{tpu_custom_call.1} parent=1 // pred_region
      %v56 = vld [vmem:[%s1] sm:$0x3]
      %v57 = vld [vmem:[#allocation3] sm:$0xff]
      %v58 = vld [vmem:[#allocation3 + $0x8] sm:$0xff]
      %v59 = vld [vmem:[#allocation3 + $0x10] sm:$0xff]
      %v60 = vld [vmem:[#allocation3 + $0x18] sm:$0xff]
      %v61 = vld [vmem:[%s2] sm:$0x3]
      %s62 = scalar_lea.vmem [#allocation3], 32
      %v63 = vld [vmem:[%s62] sm:$0xff]
      %v64 = vld [vmem:[%s62 + $0x8] sm:$0xff]
      %v65 = vld [vmem:[%s62 + $0x10] sm:$0xff]
      %v66 = vld [vmem:[%s62 + $0x18] sm:$0xff]
      %vm67 = vcmask 261120
      %v69 = vsel %vm67, %v61, 0
      %71 = vmatpush.msra.mxu0 0.0
      %72 = vmatpush.msra.mxu0 0.0
      %73 = vmatpush.msra.mxu0 0.0
      %74 = vmatpush.msra.mxu0 0.0
      %75 = vmatpush.msra.mxu0 0.0
      %76 = vmatpush.msra.mxu0 0.0
      %77 = vmatpush.msra.mxu0 0.0
      %78 = vmatpush.msra.mxu0 0.0
      %79 = vmatpush.msra.mxu0 0.0
      %80 = vmatpush.msra.mxu0 0.0
      %81 = vmatpush.msra.mxu0 0.0
      %82 = vmatpush.msra.mxu0 0.0
      %83 = vmatpush.msra.mxu0 %v66
      %84 = vmatpush.msra.mxu0 %v65
      %85 = vmatpush.msra.mxu0 %v64
      %86 = vmatpush.msra.mxu0 %v63
      %87 = vmatmul.f32.gmra.mxu0 %v69
      %v88 = vpop.f32.mrf.mxu0
      %v89 = vadd.f32 0.0, %v88
      %90 = vdwg.mxu0
      %v92 = vsel %vm67, %v56, 0
      %94 = vmatpush.msra.mxu0 0.0
      %95 = vmatpush.msra.mxu0 0.0
      %96 = vmatpush.msra.mxu0 0.0
      %97 = vmatpush.msra.mxu0 0.0
      %98 = vmatpush.msra.mxu0 0.0
      %99 = vmatpush.msra.mxu0 0.0
      %100 = vmatpush.msra.mxu0 0.0
      %101 = vmatpush.msra.mxu0 0.0
      %102 = vmatpush.msra.mxu0 0.0
      %103 = vmatpush.msra.mxu0 0.0
      %104 = vmatpush.msra.mxu0 0.0
      %105 = vmatpush.msra.mxu0 0.0
      %106 = vmatpush.msra.mxu0 %v60
      %107 = vmatpush.msra.mxu0 %v59
      %108 = vmatpush.msra.mxu0 %v58
      %109 = vmatpush.msra.mxu0 %v57
      %110 = vmatmul.f32.gmra.mxu0 %v92
      %v111 = vpop.f32.mrf.mxu0
      %v112 = vadd.f32 %v89, %v111
      %113 = vdwg.mxu0
      %v114 = vld [vmem:[%s3] sm:$0x3]
      %s115 = scalar_lea.vmem [#allocation3], 64
      %v116 = vld [vmem:[%s115] sm:$0xff]
      %v117 = vld [vmem:[%s115 + $0x8] sm:$0xff]
      %v118 = vld [vmem:[%s115 + $0x10] sm:$0xff]
      %v119 = vld [vmem:[%s115 + $0x18] sm:$0xff]
      %v121 = vsel %vm67, %v114, 0
      %123 = vmatpush.msra.mxu0 0.0
      %124 = vmatpush.msra.mxu0 0.0
      %125 = vmatpush.msra.mxu0 0.0
      %126 = vmatpush.msra.mxu0 0.0
      %127 = vmatpush.msra.mxu0 0.0
      %128 = vmatpush.msra.mxu0 0.0
      %129 = vmatpush.msra.mxu0 0.0
      %130 = vmatpush.msra.mxu0 0.0
      %131 = vmatpush.msra.mxu0 0.0
      %132 = vmatpush.msra.mxu0 0.0
      %133 = vmatpush.msra.mxu0 0.0
      %134 = vmatpush.msra.mxu0 0.0
      %135 = vmatpush.msra.mxu0 %v119
      %136 = vmatpush.msra.mxu0 %v118
      %137 = vmatpush.msra.mxu0 %v117
      %138 = vmatpush.msra.mxu0 %v116
      %139 = vmatmul.f32.gmra.mxu0 %v121
      %v140 = vpop.f32.mrf.mxu0
      %v141 = vadd.f32 0.0, %v140
      %142 = vdwg.mxu0
      %v143 = vadd.f32 %v112, %v141
      %v144 = vld [vmem:[%s6] sm:$0x1]
      %v146 = vperm.slane %v144, 0
      %v148 = vadd.f32 %v143, %v146
      %149 = vst [vmem:[#allocation2] sm:$0x3] %v148
    $region45: #{tpu_custom_call.1} parent=1 // pred_fallthru
      _
    %v150 = vld [vmem:[#allocation2] sm:$0x3]
    %v151 = vld [vmem:[%s0] sm:$0x3]
    %v152 = vld [vmem:[%s4] sm:$0xff]
    %v153 = vld [vmem:[%s4 + $0x8] sm:$0xff]
    %v154 = vld [vmem:[%s4 + $0x10] sm:$0xff]
    %v155 = vld [vmem:[%s4 + $0x18] sm:$0xff]
    %v156 = vld [vmem:[%s4 + $0x20] sm:$0xff]
    %v157 = vld [vmem:[%s4 + $0x28] sm:$0xff]
    %v158 = vld [vmem:[%s4 + $0x30] sm:$0xff]
    %v159 = vld [vmem:[%s4 + $0x38] sm:$0xff]
    %v160 = vld [vmem:[%s4 + $0x40] sm:$0xff]
    %v161 = vld [vmem:[%s4 + $0x48] sm:$0xff]
    %v162 = vld [vmem:[%s4 + $0x50] sm:$0xff]
    %v163 = vld [vmem:[%s4 + $0x58] sm:$0xff]
    %v164 = vld [vmem:[%s4 + $0x60] sm:$0xff]
    %v165 = vld [vmem:[%s4 + $0x68] sm:$0xff]
    %v166 = vld [vmem:[%s4 + $0x70] sm:$0xff]
    %v167 = vld [vmem:[%s4 + $0x78] sm:$0xff]
    %168 = vmatpush.msra.mxu0 %v167
    %169 = vmatpush.msra.mxu0 %v166
    %170 = vmatpush.msra.mxu0 %v165
    %171 = vmatpush.msra.mxu0 %v164
    %172 = vmatpush.msra.mxu0 %v163
    %173 = vmatpush.msra.mxu0 %v162
    %174 = vmatpush.msra.mxu0 %v161
    %175 = vmatpush.msra.mxu0 %v160
    %176 = vmatpush.msra.mxu0 %v159
    %177 = vmatpush.msra.mxu0 %v158
    %178 = vmatpush.msra.mxu0 %v157
    %179 = vmatpush.msra.mxu0 %v156
    %180 = vmatpush.msra.mxu0 %v155
    %181 = vmatpush.msra.mxu0 %v154
    %182 = vmatpush.msra.mxu0 %v153
    %183 = vmatpush.msra.mxu0 %v152
    %184 = vmatmul.f32.gmra.mxu0 %v151
    %v185 = vpop.f32.mrf.mxu0
    %v186 = vadd.f32 0.0, %v185
    %187 = vdwg.mxu0
    %v188 = vadd.f32 %v150, %v186
    %189 = vst [vmem:[#allocation2] sm:$0x3] %v188
    // Predicated region
    $region46: #{tpu_custom_call.1} parent=1 // pred_check
      %p190 = pneg %p52
    $region47: #{tpu_custom_call.1} parent=1 // pred_check_branch
      %192 = sbr.rel (%p190) target = $region49
    $region48: #{tpu_custom_call.1} parent=1 // pred_region
      %v193 = vld [vmem:[#allocation2] sm:$0x3]
      %v194 = vmax.f32 %v193, 0.0
      %v195 = vld [vmem:[%s7] sm:$0xff]
      %v196 = vld [vmem:[%s7 + $0x8] sm:$0xff]
      %v197 = vld [vmem:[%s7 + $0x10] sm:$0xff]
      %v198 = vld [vmem:[%s7 + $0x18] sm:$0xff]
      %v199 = vld [vmem:[%s7 + $0x20] sm:$0xff]
      %v200 = vld [vmem:[%s7 + $0x28] sm:$0xff]
      %v201 = vld [vmem:[%s7 + $0x30] sm:$0xff]
      %v202 = vld [vmem:[%s7 + $0x38] sm:$0xff]
      %v203 = vld [vmem:[%s7 + $0x40] sm:$0xff]
      %v204 = vld [vmem:[%s7 + $0x48] sm:$0xff]
      %v205 = vld [vmem:[%s7 + $0x50] sm:$0xff]
      %v206 = vld [vmem:[%s7 + $0x58] sm:$0xff]
      %v207 = vld [vmem:[%s7 + $0x60] sm:$0xff]
      %v208 = vld [vmem:[%s7 + $0x68] sm:$0xff]
      %v209 = vld [vmem:[%s7 + $0x70] sm:$0xff]
      %v210 = vld [vmem:[%s7 + $0x78] sm:$0xff]
      %v211 = vld [vmem:[%s8] sm:$0x1]
      %v213 = vperm.slane %v211, 0
      %215 = vmatpush.msra.mxu0 %v210
      %216 = vmatpush.msra.mxu0 %v209
      %217 = vmatpush.msra.mxu0 %v208
      %218 = vmatpush.msra.mxu0 %v207
      %219 = vmatpush.msra.mxu0 %v206
      %220 = vmatpush.msra.mxu0 %v205
      %221 = vmatpush.msra.mxu0 %v204
      %222 = vmatpush.msra.mxu0 %v203
      %223 = vmatpush.msra.mxu0 %v202
      %224 = vmatpush.msra.mxu0 %v201
      %225 = vmatpush.msra.mxu0 %v200
      %226 = vmatpush.msra.mxu0 %v199
      %227 = vmatpush.msra.mxu0 %v198
      %228 = vmatpush.msra.mxu0 %v197
      %229 = vmatpush.msra.mxu0 %v196
      %230 = vmatpush.msra.mxu0 %v195
      %231 = vmatmul.f32.gmra.mxu0 %v194
      %v232 = vpop.f32.mrf.mxu0
      %v233 = vadd.f32 %v213, %v232
      %234 = vdwg.mxu0
      %vm235 = vcmask 58368
      %v236 = vsel %vm235, %v233, -inf
      %237 = vmax.xlane.f32.xlu0 %v236
      %v238 = vpop.xlane.xlu0 %237
      %v239 = vsub.f32 %v233, %v238
      %v240 = vmul.f32 %v239, 1.442695
      %v241 = vpow.pop %v240
      %v242 = vsel %vm235, %v241, 0.0
      %243 = vadd.xlane.f32.xlu0 %v242
      %v244 = vpop.xlane.xlu0 %243
      %v245 = vrcp.pop %v244
      %v246 = vmul.f32 %v244, %v245
      %v247 = vsub.f32 1.0, %v246
      %v248 = vmul.f32 %v245, %v247
      %v249 = vadd.f32 %v245, %v248
      %vm250 = vweird.f32 %v244
      %vm251 = vweird.f32 %v245
      %vm252 = vmor %vm250, %vm251
      %v253 = vsel %vm252, %v245, %v249
      %v254 = vand.u32 2147483647, %v244
      %vm255 = vcmp.eq.f32.partialorder %v254, 8.507059e+37
      %v256 = vand.u32 %v244, 2147483648
      %v257 = vor.u32 1.1754944e-38, %v256
      %v258 = vsel %vm255, %v257, %v253
      %v259 = vmul.f32 %v241, %v258
      %v260 = vld [vmem:[%s1] sm:$0x3]
      %262 = vset.pattern.permute.xlu0 0
      %263 = vperm.xlu0 %262, %v259
      %v264 = vpop.permute.xlu0 %263
      %v266 = vmul.f32 %v264, %v260
      %v267 = vld [vmem:[%s2] sm:$0x3]
      %268 = vset.pattern.permute.xlu0 1
      %269 = vperm.xlu0 %268, %v259
      %v270 = vpop.permute.xlu0 %269
      %v272 = vmul.f32 %v270, %v267
      %v273 = vadd.f32 %v266, %v272
      %v274 = vld [vmem:[%s3] sm:$0x3]
      %275 = vset.pattern.permute.xlu0 2
      %276 = vperm.xlu0 %275, %v259
      %v277 = vpop.permute.xlu0 %276
      %v279 = vmul.f32 %v277, %v274
      %v280 = vadd.f32 %v273, %v279
      %vm281 = vcmask 254976
      %282 = vst.msk [vmem:[#allocation6] sm:$0x3] %vm281, %v280
      %283 = vst.msk [vmem:[#allocation7] sm:$0x3] %vm235, %v259
    $region49: #{tpu_custom_call.1} parent=1 // pred_fallthru
      _
    // Predicated region
    $region50: #{tpu_custom_call.1} parent=1 // pred_check
      _
    $region51: #{tpu_custom_call.1} parent=1 // pred_check_branch
      %285 = sbr.rel (0) target = $region53
    $region52: #{tpu_custom_call.1} parent=1 // pred_region
      %287 = vsyncadd [#allocation5], 0
      %s289 = sshll.u32 [#allocation6], 4
      %s290 = int_to_ptr.vmem [resolvable:$true] %s289
      %s291 = sshll.u32 %s9, 4
      %s292 = int_to_ptr.hbm [resolvable:$true] %s291
      %294 = dma.vmem_to_hbm [thread:$0]  %s290, 32, %s292, [#allocation5]
    $region53: #{tpu_custom_call.1} parent=1 // pred_fallthru
      _
    // Predicated region
    $region54: #{tpu_custom_call.1} parent=1 // pred_check
      _
    $region55: #{tpu_custom_call.1} parent=1 // pred_check_branch
      %296 = sbr.rel (0) target = $region57
    $region56: #{tpu_custom_call.1} parent=1 // pred_region
      %298 = vsyncadd [#allocation8], 0
      %s300 = sshll.u32 [#allocation7], 4
      %s301 = int_to_ptr.vmem [resolvable:$true] %s300
      %s302 = sshll.u32 %s10, 4
      %s303 = int_to_ptr.hbm [resolvable:$true] %s302
      %305 = dma.vmem_to_hbm [thread:$0]  %s301, 32, %s303, [#allocation8]
    $region57: #{tpu_custom_call.1} parent=1 // pred_fallthru
      _
    // Predicated region
    $region58: #{tpu_custom_call.1} parent=1 // pred_check
      _
    $region59: #{tpu_custom_call.1} parent=1 // pred_check_branch
      %307 = sbr.rel (0) target = $region61
    $region60: #{tpu_custom_call.1} parent=1 // pred_region
      %309 = dma.done [#allocation5], 32
    $region61: #{tpu_custom_call.1} parent=1 // pred_fallthru
      _
    // Predicated region
    $region62: #{tpu_custom_call.1} parent=1 // pred_check
      _
    $region63: #{tpu_custom_call.1} parent=1 // pred_check_branch
      %311 = sbr.rel (0) target = $region65
    $region64: #{tpu_custom_call.1} parent=1 // pred_region
      %313 = dma.done [#allocation8], 32
    $region65: #{tpu_custom_call.1} parent=1 // pred_fallthru
      _
    %314 = vsyncpa [#allocation4], 1
    %315 = vsyncpa [#allocation5], 1
    %316 = vsyncpa [#allocation8], 1

</llo_original>
